<compile_context>
chip_gen: v7x
topology: tpu7x:2x2x1
jax: 0.10.0
libtpu: 0.0.40
codegen_flags: <defaults>
</compile_context>

<pallas_src>
import functools
import math

import jax
import jax.numpy as jnp
import numpy as np
from jax.experimental import pallas as pl
from jax.experimental.pallas import tpu as pltpu


def precompute_dictionaries(z1, z2,
                            w1v, b1v,
                            w2k, b2k, w2v, b2v,
                            wvq, bvq, wsq, bsq,
                            compute_dtype=jnp.bfloat16):
    """x-independent dictionary projections.  Cache the result across forwards."""
    if int(z1.shape[0]) != 1:
        # The module builds z1 as lin_dict.mean(0)[None], i.e. always one row.
        # TODO(synk): support a multi-row linguistic dictionary (needs its own
        # softmax branch in the hot kernel).
        raise ValueError(f"z1 must have shape (1, glove_dim); got {z1.shape}")

    f32 = jnp.float32
    z1 = z1.astype(f32)
    z2 = z2.astype(f32)
    D = int(w2k.shape[1])
    scale = 1.0 / math.sqrt(D)

    z2k = z2 @ w2k.astype(f32) + b2k.astype(f32)                           # (N2, D)
    kT = (z2k * scale).T                                                   # (D, N2)
    wprime = (z2 @ w2v.astype(f32) + b2v.astype(f32)) @ wvq.astype(f32)    # (N2, D)
    z1v = z1 @ w1v.astype(f32) + b1v.astype(f32)                           # (1, D)
    # softmax over z1's single key == 1.0  =>  S == z1v for every token.
    c = (z1v @ wsq.astype(f32) + bsq.astype(f32) + bvq.astype(f32)).reshape(1, D)

    return kT.astype(compute_dtype), wprime.astype(compute_dtype), c.astype(f32)


def _ci_kernel(x_ref, kT_ref, wprime_ref, c_ref, o_ref, *, compute_dtype):
    # x_ref:      (T, D)  token tile (streamed, model dtype)
    # kT_ref:     (D, N2) pre-scaled, pre-transposed visual keys (resident)
    # wprime_ref: (N2, D) visual values fused with the v_q weight (resident)
    # c_ref:      (1, D)  constant row = s_q(z1_v(z1)) + b_vq (resident, f32)
    exact = jnp.dtype(compute_dtype) == jnp.dtype(jnp.float32)

    x = x_ref[...].astype(compute_dtype)                                    # (T, D)
    logits = jnp.dot(x, kT_ref[...],
                     preferred_element_type=jnp.float32)                    # (T, N2)
    logits = logits - jnp.max(logits, axis=-1, keepdims=True)               # stable softmax
    p = jnp.exp(logits)                                                     # unnormalized
    denom = jnp.sum(p, axis=-1, keepdims=True)                              # (T, 1)
    pv = jnp.dot(p.astype(compute_dtype), wprime_ref[...],
                 preferred_element_type=jnp.float32)                        # (T, D)
    inv = pl.reciprocal(denom, approx=not exact)                            # EUP (exact on f32 path)
    o_ref[...] = (pv * inv + c_ref[...]).astype(o_ref.dtype)


def causal_intervention_forward(x, z1, z2,
                                w1k, b1k, w1v, b1v,
                                w2k, b2k, w2v, b2v,
                                wvq, bvq, wsq, bsq,
                                *, tile_tokens=512,
                                compute_dtype=jnp.bfloat16,
                                precomputed=None):
    """Pallas equivalent of Causual_intervention.forward.

    x:  (..., D)  features, D == input_encoding_size
    z1: (1, G1)   linguistic dictionary (already mean-reduced, as in __init__)
    z2: (N2, G2)  visual dictionary
    weights are (in_features, out_features) == PyTorch weight.T; biases (out,)
    `precomputed`: optional cached output of precompute_dictionaries().
    """
    # z1_k never affects the forward output: softmax over z1's single key == 1.
    del w1k, b1k

    orig_shape = x.shape
    D = int(orig_shape[-1])
    N = int(np.prod(orig_shape[:-1]))
    N2 = int(z2.shape[0])

    if precomputed is None:
        precomputed = precompute_dictionaries(z1, z2, w1v, b1v, w2k, b2k,
                                              w2v, b2v, wvq, bvq, wsq, bsq,
                                              compute_dtype=compute_dtype)
    kT, wprime, c_row = precomputed

    # ---- token tiling: stream x / out in the model dtype -------------------
    x2 = x.reshape(N, D)
    T = int(tile_tokens)
    if N < 2 * T:
        # Shrink so the "parallel" grid has >= 2 steps when possible (v7x has
        # two TensorCores); keep T a sublane multiple of 8.
        half = -(-N // 2)                      # ceil(N / 2)
        T = max(8, -(-half // 8) * 8)          # round up to multiple of 8
    n_pad = -(-N // T) * T
    if n_pad != N:
        x2 = jnp.pad(x2, ((0, n_pad - N), (0, 0)))    # zero rows: finite, discarded

    # VMEM budget hint: residents + double-buffered streamed tiles + slack.
    cbytes = jnp.dtype(compute_dtype).itemsize
    xbytes = jnp.dtype(x.dtype).itemsize
    resident_bytes = 2 * N2 * D * cbytes + D * 4
    stream_bytes = 2 * 2 * T * D * xbytes            # x + out, double-buffered
    vmem_limit = int(min(64 << 20, max(16 << 20, 4 * (resident_bytes + stream_bytes))))
    # TODO(synk): for dictionaries too large for VMEM (N2 in the thousands with
    # D >= 512), tile the N2 axis with a flash-style online softmax instead of
    # keeping kT / W' fully resident.

    out = pl.pallas_call(
        functools.partial(_ci_kernel, compute_dtype=compute_dtype),
        out_shape=jax.ShapeDtypeStruct((n_pad, D), x.dtype),
        grid_spec=pltpu.PrefetchScalarGridSpec(
            num_scalar_prefetch=0,
            grid=(n_pad // T,),
            in_specs=[
                pl.BlockSpec((T, D), lambda i: (i, 0)),     # x tile (pipelined)
                pl.BlockSpec((D, N2), lambda i: (0, 0)),    # scaled keys^T (resident)
                pl.BlockSpec((N2, D), lambda i: (0, 0)),    # fused values W' (resident)
                pl.BlockSpec((1, D), lambda i: (0, 0)),     # constant row (resident)
            ],
            out_specs=pl.BlockSpec((T, D), lambda i: (i, 0)),
        ),
        compiler_params=pltpu.CompilerParams(
            dimension_semantics=("parallel",),   # token tiles are independent
            vmem_limit_bytes=vmem_limit,
        ),
    )(x2, kT, wprime, c_row)

    return out[:N].reshape(orig_shape)


if __name__ == "__main__":
    # Small deterministic shapes consistent with the module.
    B, S = 2, 8        # batch, sequence of feature vectors
    D = 128            # input_encoding_size
    G1 = 128           # glove_dim
    G2 = 256           # att_feat_size
    N2 = 128           # rows of the visual dictionary (z2)

    key = jax.random.PRNGKey(0)
    ks = jax.random.split(key, 16)

    # z1/z2 stand in for np.load(opt.lin_dict).mean(0)[None] and np.load(opt.visual_dict)
    z1 = jax.random.normal(ks[0], (1, G1), dtype=jnp.float32)
    z2 = jax.random.normal(ks[1], (N2, G2), dtype=jnp.float32)

    def linear_init(kw, kb, fan_in, fan_out):
        bound = 1.0 / math.sqrt(fan_in)
        w = jax.random.uniform(kw, (fan_in, fan_out), jnp.float32, -bound, bound)
        b = jax.random.uniform(kb, (fan_out,), jnp.float32, -bound, bound)
        return w, b

    w1k, b1k = linear_init(ks[2], ks[3], G1, D)
    w1v, b1v = linear_init(ks[4], ks[5], G1, D)
    w2k, b2k = linear_init(ks[6], ks[7], G2, D)
    w2v, b2v = linear_init(ks[8], ks[9], G2, D)
    wvq, bvq = linear_init(ks[10], ks[11], D, D)
    wsq, bsq = linear_init(ks[12], ks[13], D, D)

    x = jax.random.normal(ks[14], (B, S, D), dtype=jnp.float32)

    # Pure-JAX reference implementing the PyTorch forward verbatim (f32).
    def reference(x):
        d = x.shape[-1]
        z1k = z1 @ w1k + b1k                                   # (1, D)
        z2k = z2 @ w2k + b2k                                   # (N2, D)
        att_S = jax.nn.softmax((x @ z1k.T) / math.sqrt(d), axis=-1)
        S = att_S @ (z1 @ w1v + b1v)
        att_V = jax.nn.softmax((x @ z2k.T) / math.sqrt(d), axis=-1)
        V = att_V @ (z2 @ w2v + b2v)
        return V @ wvq + bvq + S @ wsq + bsq

    ref = np.asarray(reference(x))

    # 1) exact path (f32 MXU operands): tight tolerance validates structure.
    out_f32 = causal_intervention_forward(x, z1, z2,
                                          w1k, b1k, w1v, b1v,
                                          w2k, b2k, w2v, b2v,
                                          wvq, bvq, wsq, bsq,
                                          compute_dtype=jnp.float32)
    out_f32 = jax.block_until_ready(out_f32)
    assert out_f32.shape == x.shape
    np.testing.assert_allclose(np.asarray(out_f32), ref, rtol=1e-4, atol=1e-4)

    # 2) fast path (bf16 MXU operands, f32 accumulation), with the
    #    x-independent dictionary projections precomputed once and reused.
    cached = precompute_dictionaries(z1, z2, w1v, b1v, w2k, b2k, w2v, b2v,
                                     wvq, bvq, wsq, bsq,
                                     compute_dtype=jnp.bfloat16)
    out_bf16 = causal_intervention_forward(x, z1, z2,
                                           w1k, b1k, w1v, b1v,
                                           w2k, b2k, w2v, b2v,
                                           wvq, bvq, wsq, bsq,
                                           compute_dtype=jnp.bfloat16,
                                           precomputed=cached)
    out_bf16 = jax.block_until_ready(out_bf16)
    assert out_bf16.shape == x.shape
    np.testing.assert_allclose(np.asarray(out_bf16), ref, rtol=5e-2, atol=5e-2)

    print("KERNEL_OK")
</pallas_src>

<mosaic_0001>
module attributes {stable_mosaic.version = 11 : i64} {
  func.func @_ci_kernel(%arg0: i32, %arg1: memref<8x128xf32, #tpu.memory_space<vmem>>, %arg2: memref<128x128xf32, #tpu.memory_space<vmem>>, %arg3: memref<128x128xf32, #tpu.memory_space<vmem>>, %arg4: memref<1x128xf32, #tpu.memory_space<vmem>>, %arg5: memref<8x128xf32, #tpu.memory_space<vmem>>) attributes {dimension_semantics = [#tpu.dimension_semantics<parallel>], iteration_bounds = array<i64: 2>, scalar_prefetch = 0 : i64, scratch_operands = 0 : i64, tpu.core_type = #tpu.core_type<tc>, window_params = [{transform_indices = @transform_0, window_bounds = array<i64: 8, 128>}, {pipeline_mode = #tpu.pipeline_mode<synchronous>, transform_indices = @transform_1, window_bounds = array<i64: 128, 128>}, {pipeline_mode = #tpu.pipeline_mode<synchronous>, transform_indices = @transform_2, window_bounds = array<i64: 128, 128>}, {pipeline_mode = #tpu.pipeline_mode<synchronous>, transform_indices = @transform_3, window_bounds = array<i64: 1, 128>}, {transform_indices = @transform_4, window_bounds = array<i64: 8, 128>}]} {
    %c0 = arith.constant 0 : index
    %c0_0 = arith.constant 0 : index
    %0 = vector.load %arg1[%c0, %c0_0] : memref<8x128xf32, #tpu.memory_space<vmem>>, vector<8x128xf32>
    %c0_1 = arith.constant 0 : index
    %c0_2 = arith.constant 0 : index
    %1 = vector.load %arg2[%c0_1, %c0_2] : memref<128x128xf32, #tpu.memory_space<vmem>>, vector<128x128xf32>
    %cst = arith.constant dense<0.000000e+00> : vector<8x128xf32>
    %2 = tpu.matmul %0, %1, %cst {dimension_numbers = #tpu.dot_dimension_numbers<[1], [0], [0], [1], [0, 0, 1, 1], [], []>} : vector<8x128xf32>, vector<128x128xf32>, vector<8x128xf32> -> vector<8x128xf32>
    %cst_3 = arith.constant dense<0xFF800000> : vector<8xf32>
    %3 = vector.multi_reduction <maximumf>, %2, %cst_3 [1] : vector<8x128xf32> to vector<8xf32>
    %4 = vector.shape_cast %3 : vector<8xf32> to vector<8x1xf32>
    %5 = vector.broadcast %4 : vector<8x1xf32> to vector<8x128xf32>
    %6 = arith.subf %2, %5 : vector<8x128xf32>
    %7 = math.exp %6 : vector<8x128xf32>
    %cst_4 = arith.constant dense<0.000000e+00> : vector<8xf32>
    %8 = vector.multi_reduction <add>, %7, %cst_4 [1] : vector<8x128xf32> to vector<8xf32>
    %9 = vector.shape_cast %8 : vector<8xf32> to vector<8x1xf32>
    %c0_5 = arith.constant 0 : index
    %c0_6 = arith.constant 0 : index
    %10 = vector.load %arg3[%c0_5, %c0_6] : memref<128x128xf32, #tpu.memory_space<vmem>>, vector<128x128xf32>
    %cst_7 = arith.constant dense<0.000000e+00> : vector<8x128xf32>
    %11 = tpu.matmul %7, %10, %cst_7 {dimension_numbers = #tpu.dot_dimension_numbers<[1], [0], [0], [1], [0, 0, 1, 1], [], []>} : vector<8x128xf32>, vector<128x128xf32>, vector<8x128xf32> -> vector<8x128xf32>
    %12 = tpu.reciprocal %9 : vector<8x1xf32> -> vector<8x1xf32>
    %13 = vector.broadcast %12 : vector<8x1xf32> to vector<8x128xf32>
    %14 = arith.mulf %11, %13 : vector<8x128xf32>
    %c0_8 = arith.constant 0 : index
    %c0_9 = arith.constant 0 : index
    %15 = vector.load %arg4[%c0_8, %c0_9] : memref<1x128xf32, #tpu.memory_space<vmem>>, vector<1x128xf32>
    %16 = vector.broadcast %15 : vector<1x128xf32> to vector<8x128xf32>
    %17 = arith.addf %14, %16 : vector<8x128xf32>
    %c0_10 = arith.constant 0 : index
    %c0_11 = arith.constant 0 : index
    %18 = vector.load %arg5[%c0_10, %c0_11] : memref<8x128xf32, #tpu.memory_space<vmem>>, vector<8x128xf32>
    tpu.vector_store %arg5[%c0_10, %c0_11], %17 {strides = array<i32>} : memref<8x128xf32, #tpu.memory_space<vmem>>, vector<8x128xf32>,
    return
  }
  func.func @transform_0(%arg0: i32) -> (i32, i32) {
    %c0_i32 = arith.constant 0 : i32
    %c0_i32_0 = arith.constant 0 : i32
    return %arg0, %c0_i32 : i32, i32
  }
  func.func @transform_1(%arg0: i32) -> (i32, i32) {
    %c0_i32 = arith.constant 0 : i32
    %c0_i32_0 = arith.constant 0 : i32
    %c0_i32_1 = arith.constant 0 : i32
    return %c0_i32, %c0_i32_0 : i32, i32
  }
  func.func @transform_2(%arg0: i32) -> (i32, i32) {
    %c0_i32 = arith.constant 0 : i32
    %c0_i32_0 = arith.constant 0 : i32
    %c0_i32_1 = arith.constant 0 : i32
    return %c0_i32, %c0_i32_0 : i32, i32
  }
  func.func @transform_3(%arg0: i32) -> (i32, i32) {
    %c0_i32 = arith.constant 0 : i32
    %c0_i32_0 = arith.constant 0 : i32
    %c0_i32_1 = arith.constant 0 : i32
    return %c0_i32, %c0_i32_0 : i32, i32
  }
  func.func @transform_4(%arg0: i32) -> (i32, i32) {
    %c0_i32 = arith.constant 0 : i32
    %c0_i32_0 = arith.constant 0 : i32
    return %arg0, %c0_i32 : i32, i32
  }
}

</mosaic_0001>

<llo_original>
// kernel: tpu_custom_call.1
$region0: #{tpu_custom_call.1}
  #allocation0 [shape = 'u32[]', space=smem, size = 0x4, offset = 0x4, fixed_abs, tag = 'smem constant byte address 0x4 - core index']
  #allocation1 [shape = 'u32[144,128]{1,0:T(1,128)}', space=vmem, size = 0x12000, scoped, tag = 'internal scratch']
  %s0 = inlined_call_operand.hbm [shape: f32[16,128], index: 0, kind: input, shape index: {}]
  %s1 = inlined_call_operand.hbm [shape: f32[128,128], index: 1, kind: input, shape index: {}]
  %s2 = inlined_call_operand.hbm [shape: f32[128,128], index: 2, kind: input, shape index: {}]
  %s3 = inlined_call_operand.vmem [shape: f32[1,128], index: 3, kind: input, shape index: {}]
  %s4 = inlined_call_operand.hbm [shape: f32[16,128], index: 4, kind: output, shape index: {}]
  %s5 = sld [smem:[#allocation0]]
  $region61: #{tpu_custom_call.1} parent=0
    _
  %s7 = ssub.s32 1, %s5
  %s8 = scalar_select 0, %s7, %s5
  $region1: #{tpu_custom_call.1} parent=0
    #allocation2 [shape = 'u8[8192]{0}', space=vmem, size = 0x2000, scoped, tag = 'input window, operand 0']
    #allocation3 [shape = 's32[2]{0}', space=sflag, size = 0x8, scoped, tag = 'scoped memory for tpu_custom_call.1']
    #allocation4 [shape = 's32[2]{0}', space=sflag, size = 0x8, scoped, tag = 'scoped memory for tpu_custom_call.1']
    #allocation5 [shape = 'u8[65536]{0}', space=vmem, size = 0x10000, scoped, tag = 'input window, operand 1, single buffered']
    #allocation6 [shape = 's32[1]{0}', space=sflag, size = 0x4, scoped, tag = 'scoped memory for tpu_custom_call.1']
    #allocation7 [shape = 'u8[65536]{0}', space=vmem, size = 0x10000, scoped, tag = 'input window, operand 2, single buffered']
    #allocation8 [shape = 'u8[8192]{0}', space=vmem, size = 0x2000, scoped, tag = 'output window, operand 0']
    %9 = vsyncpa [#allocation3], 0
    %s10 = scalar_lea.sflag [#allocation3], 1
    %11 = vsyncpa %s10, 0
    %12 = vsyncpa [#allocation6], 0
    %13 = vsyncpa [#allocation4], 0
    %s14 = scalar_lea.sflag [#allocation4], 1
    %15 = vsyncpa %s14, 0
    loop: start=0, step=1, limit=4
    $region2: #{tpu_custom_call.1} parent=1 // loop_pre_header
      _
    $region3: #{tpu_custom_call.1} parent=1 // loop_header
      %s17 = sphi 0, %s21
      %p18 = scmp.ge.s32.totalorder %s17, 4
      %s27 = sphi 0, %s29
      %s30 = sphi 0, %s27
      %s31 = sphi 0, %s30
      %s47 = sphi 0, %s31
      %s51 = sphi 0, %s51
      %s53 = sphi 0, %s51
      %s54 = sphi 0, %s53
      %s68 = sphi 0, %s54
      %s72 = sphi 0, %s72
      %s74 = sphi 0, %s72
      %s75 = sphi 0, %s74
      %s89 = sphi 0, %s75
      %s93 = sphi 0, %s93
      %s95 = sphi 0, %s93
      %s96 = sphi 0, %s95
      %s110 = sphi 0, %s96
      %s116 = sphi 0, %s118
      %s119 = sphi 0, %s116
      %s120 = sphi 0, %s119
      %s136 = sphi 0, %s120
    $region4: #{tpu_custom_call.1} parent=1 // loop_header_branch
      %20 = sbr.rel (%p18) target = $region8
    $region5: #{tpu_custom_call.1} parent=1 // loop_body
      %s22 = ssub.s32 %s17, 1
      %s23 = ssub.s32 %s17, 2
      %s24 = sadd.s32 %s17, 1
      %s25 = ssub.s32 %s17, %s24
      %p26 = scmp.eq.s32.totalorder %s25, 0
      %s28 = sadd.s32 %s27, 1
      %s29 = scalar_select %p26, %s27, %s28
      %p32 = pneg %p26
      %p33 = scmp.eq.s32.totalorder %s17, 1
      %p34 = por %p32, %p33
      %p35 = scmp.ne.s32.totalorder %s27, %s30
      %p36 = scmp.eq.s32.totalorder %s17, 0
      %p37 = por %p35, %p36
      %p38 = scmp.ne.s32.totalorder %s27, %s30
      %p39 = scmp.eq.s32.totalorder %s22, 1
      %p40 = por %p38, %p39
      %p41 = scmp.ne.s32.totalorder %s30, %s31
      %p42 = scmp.eq.s32.totalorder %s22, 0
      %p43 = por %p41, %p42
      %p44 = scmp.ne.s32.totalorder %s30, %s31
      %p45 = scmp.eq.s32.totalorder %s23, 1
      %p46 = por %p44, %p45
      %p48 = scmp.ne.s32.totalorder %s31, %s47
      %p49 = scmp.eq.s32.totalorder %s23, 0
      %p50 = por %p48, %p49
      %s52 = sadd.s32 %s51, 1
      %p55 = scmp.eq.s32.totalorder %s17, 1
      %p56 = scmp.ne.s32.totalorder %s51, %s53
      %p57 = scmp.eq.s32.totalorder %s17, 0
      %p58 = por %p56, %p57
      %p59 = scmp.ne.s32.totalorder %s51, %s53
      %p60 = scmp.eq.s32.totalorder %s22, 1
      %p61 = por %p59, %p60
      %p62 = scmp.ne.s32.totalorder %s53, %s54
      %p63 = scmp.eq.s32.totalorder %s22, 0
      %p64 = por %p62, %p63
      %p65 = scmp.ne.s32.totalorder %s53, %s54
      %p66 = scmp.eq.s32.totalorder %s23, 1
      %p67 = por %p65, %p66
      %p69 = scmp.ne.s32.totalorder %s54, %s68
      %p70 = scmp.eq.s32.totalorder %s23, 0
      %p71 = por %p69, %p70
      %s73 = sadd.s32 %s72, 1
      %p76 = scmp.eq.s32.totalorder %s17, 1
      %p77 = scmp.ne.s32.totalorder %s72, %s74
      %p78 = scmp.eq.s32.totalorder %s17, 0
      %p79 = por %p77, %p78
      %p80 = scmp.ne.s32.totalorder %s72, %s74
      %p81 = scmp.eq.s32.totalorder %s22, 1
      %p82 = por %p80, %p81
      %p83 = scmp.ne.s32.totalorder %s74, %s75
      %p84 = scmp.eq.s32.totalorder %s22, 0
      %p85 = por %p83, %p84
      %p86 = scmp.ne.s32.totalorder %s74, %s75
      %p87 = scmp.eq.s32.totalorder %s23, 1
      %p88 = por %p86, %p87
      %p90 = scmp.ne.s32.totalorder %s75, %s89
      %p91 = scmp.eq.s32.totalorder %s23, 0
      %p92 = por %p90, %p91
      %s94 = sadd.s32 %s93, 1
      %p97 = scmp.eq.s32.totalorder %s17, 1
      %p98 = scmp.ne.s32.totalorder %s93, %s95
      %p99 = scmp.eq.s32.totalorder %s17, 0
      %p100 = por %p98, %p99
      %p101 = scmp.ne.s32.totalorder %s93, %s95
      %p102 = scmp.eq.s32.totalorder %s22, 1
      %p103 = por %p101, %p102
      %p104 = scmp.ne.s32.totalorder %s95, %s96
      %p105 = scmp.eq.s32.totalorder %s22, 0
      %p106 = por %p104, %p105
      %p107 = scmp.ne.s32.totalorder %s95, %s96
      %p108 = scmp.eq.s32.totalorder %s23, 1
      %p109 = por %p107, %p108
      %p111 = scmp.ne.s32.totalorder %s96, %s110
      %p112 = scmp.eq.s32.totalorder %s23, 0
      %p113 = por %p111, %p112
      %s114 = ssub.s32 %s17, %s24
      %p115 = scmp.eq.s32.totalorder %s114, 0
      %s117 = sadd.s32 %s116, 1
      %s118 = scalar_select %p115, %s116, %s117
      %p121 = pneg %p115
      %p122 = scmp.eq.s32.totalorder %s17, 1
      %p123 = por %p121, %p122
      %p124 = scmp.ne.s32.totalorder %s116, %s119
      %p125 = scmp.eq.s32.totalorder %s17, 0
      %p126 = por %p124, %p125
      %p127 = scmp.ne.s32.totalorder %s116, %s119
      %p128 = scmp.eq.s32.totalorder %s22, 1
      %p129 = por %p127, %p128
      %p130 = scmp.ne.s32.totalorder %s119, %s120
      %p131 = scmp.eq.s32.totalorder %s22, 0
      %p132 = por %p130, %p131
      %p133 = scmp.ne.s32.totalorder %s119, %s120
      %p134 = scmp.eq.s32.totalorder %s23, 1
      %p135 = por %p133, %p134
      %p137 = scmp.ne.s32.totalorder %s120, %s136
      %p138 = scmp.eq.s32.totalorder %s23, 0
      %p139 = por %p137, %p138
      %p140 = scmp.le.s32.totalorder 1, %s17
      %p141 = scmp.lt.s32.totalorder %s17, 3
      %p142 = pnand %p140, %p141
      %p143 = pneg %p142
      // Predicated region
      $region9: #{tpu_custom_call.1} parent=5 // pred_check
        _
      $region10: #{tpu_custom_call.1} parent=5 // pred_check_branch
        %145 = sbr.rel (%p142) target = $region12
      $region11: #{tpu_custom_call.1} parent=5 // pred_region
        %s146 = ssub.s32 %s17, 1
        // Predicated region
        $region13: #{tpu_custom_call.1} parent=11 // pred_check
          %p147 = pneg %p64
        $region14: #{tpu_custom_call.1} parent=11 // pred_check_branch
          %149 = sbr.rel (%p147) target = $region16
        $region15: #{tpu_custom_call.1} parent=11 // pred_region
          %s151 = ssub.s32 2048, 2048
          %152 = vsyncadd [#allocation6], %s151
          %s153 = sshll.u32 [#allocation5], 4
          %s154 = int_to_ptr.vmem [resolvable:$true] %s153
          %159 = dma.hbm_to_vmem [thread:$0]  %s1, 2048, %s154, [#allocation6], 128, 128, 8
        $region16: #{tpu_custom_call.1} parent=11 // pred_fallthru
          _
        // Predicated region
        $region17: #{tpu_custom_call.1} parent=11 // pred_check
          %p160 = pneg %p85
        $region18: #{tpu_custom_call.1} parent=11 // pred_check_branch
          %162 = sbr.rel (%p160) target = $region20
        $region19: #{tpu_custom_call.1} parent=11 // pred_region
          %s164 = ssub.s32 2048, 2048
          %165 = vsyncadd [#allocation6], %s164
          %s166 = sshll.u32 [#allocation7], 4
          %s167 = int_to_ptr.vmem [resolvable:$true] %s166
          %172 = dma.hbm_to_vmem [thread:$0]  %s2, 2048, %s167, [#allocation6], 128, 128, 8
        $region20: #{tpu_custom_call.1} parent=11 // pred_fallthru
          _
        // Predicated region
        $region21: #{tpu_custom_call.1} parent=11 // pred_check
          %p173 = pneg %p106
        $region22: #{tpu_custom_call.1} parent=11 // pred_check_branch
          %175 = sbr.rel (%p173) target = $region24
        $region23: #{tpu_custom_call.1} parent=11 // pred_region
          _
        $region24: #{tpu_custom_call.1} parent=11 // pred_fallthru
          _
      $region12: #{tpu_custom_call.1} parent=5 // pred_fallthru
        _
      %p176 = scmp.lt.s32.totalorder %s17, 2
      // Predicated region
      $region25: #{tpu_custom_call.1} parent=5 // pred_check
        %p177 = pneg %p176
      $region26: #{tpu_custom_call.1} parent=5 // pred_check_branch
        %179 = sbr.rel (%p177) target = $region28
      $region27: #{tpu_custom_call.1} parent=5 // pred_region
        // Predicated region
        $region29: #{tpu_custom_call.1} parent=27 // pred_check
          %p180 = pneg %p37
        $region30: #{tpu_custom_call.1} parent=27 // pred_check_branch
          %182 = sbr.rel (%p180) target = $region32
        $region31: #{tpu_custom_call.1} parent=27 // pred_region
          %s183 = sand.u32 %s27, 1
          %s184 = scalar_lea.sflag [#allocation3], %s183
          %s185 = sand.u32 %s27, 1
          %s186 = smul.addr %s185, 8
          %s187 = scalar_lea.vmem [#allocation2], %s186
          %s189 = ssub.s32 128, 128
          %190 = vsyncadd %s184, %s189
          %s191 = smul.addr %s17, 128
          %s192 = scalar_lea.hbm %s0, %s191
          %s194 = sshll.u32 %s187, 4
          %s195 = int_to_ptr.vmem [resolvable:$true] %s194
          %197 = dma.hbm_to_vmem [thread:$0]  %s192, 128, %s195, %s184
        $region32: #{tpu_custom_call.1} parent=27 // pred_fallthru
          _
      $region28: #{tpu_custom_call.1} parent=5 // pred_fallthru
        _
      %p198 = scmp.le.s32.totalorder 1, %s17
      %p199 = scmp.lt.s32.totalorder %s17, 3
      %p200 = pnand %p198, %p199
      %p201 = pneg %p200
      // Predicated region
      $region33: #{tpu_custom_call.1} parent=5 // pred_check
        _
      $region34: #{tpu_custom_call.1} parent=5 // pred_check_branch
        %203 = sbr.rel (%p200) target = $region36
      $region35: #{tpu_custom_call.1} parent=5 // pred_region
        %s204 = ssub.s32 %s17, 1
        %s205 = sand.u32 %s30, 1
        %s206 = scalar_lea.sflag [#allocation3], %s205
        %s207 = sand.u32 %s30, 1
        %s208 = smul.addr %s207, 8
        %s209 = scalar_lea.vmem [#allocation2], %s208
        // Predicated region
        $region37: #{tpu_custom_call.1} parent=35 // pred_check
          %p210 = pneg %p43
        $region38: #{tpu_custom_call.1} parent=35 // pred_check_branch
          %212 = sbr.rel (%p210) target = $region40
        $region39: #{tpu_custom_call.1} parent=35 // pred_region
          %213 = dma.done %s206, 128
        $region40: #{tpu_custom_call.1} parent=35 // pred_fallthru
          _
        // Predicated region
        $region41: #{tpu_custom_call.1} parent=35 // pred_check
          %p214 = pneg %p64
        $region42: #{tpu_custom_call.1} parent=35 // pred_check_branch
          %216 = sbr.rel (%p214) target = $region44
        $region43: #{tpu_custom_call.1} parent=35 // pred_region
          %217 = dma.done [#allocation6], 2048
        $region44: #{tpu_custom_call.1} parent=35 // pred_fallthru
          _
        // Predicated region
        $region45: #{tpu_custom_call.1} parent=35 // pred_check
          %p218 = pneg %p85
        $region46: #{tpu_custom_call.1} parent=35 // pred_check_branch
          %220 = sbr.rel (%p218) target = $region48
        $region47: #{tpu_custom_call.1} parent=35 // pred_region
          %221 = dma.done [#allocation6], 2048
        $region48: #{tpu_custom_call.1} parent=35 // pred_fallthru
          _
        %s222 = sand.u32 %s30, 1
        %s223 = scalar_lea.sflag [#allocation3], %s222
        %s224 = sand.u32 %s30, 1
        %s225 = smul.addr %s224, 8
        %s226 = scalar_lea.vmem [#allocation2], %s225
        %p227 = pneg %p43
        %p228 = pneg %p40
        %p229 = pneg %p64
        %p230 = pneg %p61
        %p231 = pneg %p85
        %p232 = pneg %p82
        %p233 = pneg %p106
        %p234 = pneg %p103
        %p235 = pneg %p132
        %p236 = pneg %p129
        %s237 = sand.u32 %s119, 1
        %s238 = scalar_lea.sflag [#allocation4], %s237
        %s239 = sand.u32 %s119, 1
        %s240 = smul.addr %s239, 8
        %s241 = scalar_lea.vmem [#allocation8], %s240
        %v242 = vld [vmem:[%s209] sm:$0xff]
        %v243 = vld [vmem:[#allocation5] sm:$0xff]
        %v244 = vld [vmem:[#allocation5 + $0x8] sm:$0xff]
        %v245 = vld [vmem:[#allocation5 + $0x10] sm:$0xff]
        %v246 = vld [vmem:[#allocation5 + $0x18] sm:$0xff]
        %v247 = vld [vmem:[#allocation5 + $0x20] sm:$0xff]
        %v248 = vld [vmem:[#allocation5 + $0x28] sm:$0xff]
        %v249 = vld [vmem:[#allocation5 + $0x30] sm:$0xff]
        %v250 = vld [vmem:[#allocation5 + $0x38] sm:$0xff]
        %v251 = vld [vmem:[#allocation5 + $0x40] sm:$0xff]
        %v252 = vld [vmem:[#allocation5 + $0x48] sm:$0xff]
        %v253 = vld [vmem:[#allocation5 + $0x50] sm:$0xff]
        %v254 = vld [vmem:[#allocation5 + $0x58] sm:$0xff]
        %v255 = vld [vmem:[#allocation5 + $0x60] sm:$0xff]
        %v256 = vld [vmem:[#allocation5 + $0x68] sm:$0xff]
        %v257 = vld [vmem:[#allocation5 + $0x70] sm:$0xff]
        %v258 = vld [vmem:[#allocation5 + $0x78] sm:$0xff]
        %259 = vmatprep.subr.mxu0 0.0
        %260 = vmatpush1.msra.mxu0 %v243
        %261 = vmatprep.subr.mxu0 0.0
        %262 = vmatpush1.msra.mxu0 %v244
        %263 = vmatprep.subr.mxu0 0.0
        %264 = vmatpush1.msra.mxu0 %v245
        %265 = vmatprep.subr.mxu0 0.0
        %266 = vmatpush1.msra.mxu0 %v246
        %267 = vmatprep.subr.mxu0 0.0
        %268 = vmatpush1.msra.mxu0 %v247
        %269 = vmatprep.subr.mxu0 0.0
        %270 = vmatpush1.msra.mxu0 %v248
        %271 = vmatprep.subr.mxu0 0.0
        %272 = vmatpush1.msra.mxu0 %v249
        %273 = vmatprep.subr.mxu0 0.0
        %274 = vmatpush1.msra.mxu0 %v250
        %275 = vmatprep.subr.mxu0 0.0
        %276 = vmatpush1.msra.mxu0 %v251
        %277 = vmatprep.subr.mxu0 0.0
        %278 = vmatpush1.msra.mxu0 %v252
        %279 = vmatprep.subr.mxu0 0.0
        %280 = vmatpush1.msra.mxu0 %v253
        %281 = vmatprep.subr.mxu0 0.0
        %282 = vmatpush1.msra.mxu0 %v254
        %283 = vmatprep.subr.mxu0 0.0
        %284 = vmatpush1.msra.mxu0 %v255
        %285 = vmatprep.subr.mxu0 0.0
        %286 = vmatpush1.msra.mxu0 %v256
        %287 = vmatprep.subr.mxu0 0.0
        %288 = vmatpush1.msra.mxu0 %v257
        %289 = vmatprep.subr.mxu0 0.0
        %290 = vmatpush1.msra.mxu0 %v258
        %291 = vmatprep.subr.mxu0 0.0
        %292 = vmatpush1.msra.mxu0 0.0
        %293 = vmatprep.subr.mxu0 0.0
        %294 = vmatpush1.msra.mxu0 0.0
        %295 = vmatprep.subr.mxu0 0.0
        %296 = vmatpush1.msra.mxu0 0.0
        %297 = vmatprep.subr.mxu0 0.0
        %298 = vmatpush1.msra.mxu0 0.0
        %299 = vmatprep.subr.mxu0 0.0
        %300 = vmatpush1.msra.mxu0 0.0
        %301 = vmatprep.subr.mxu0 0.0
        %302 = vmatpush1.msra.mxu0 0.0
        %303 = vmatprep.subr.mxu0 0.0
        %304 = vmatpush1.msra.mxu0 0.0
        %305 = vmatprep.subr.mxu0 0.0
        %306 = vmatpush1.msra.mxu0 0.0
        %307 = vmatprep.subr.mxu0 0.0
        %308 = vmatpush1.msra.mxu0 0.0
        %309 = vmatprep.subr.mxu0 0.0
        %310 = vmatpush1.msra.mxu0 0.0
        %311 = vmatprep.subr.mxu0 0.0
        %312 = vmatpush1.msra.mxu0 0.0
        %313 = vmatprep.subr.mxu0 0.0
        %314 = vmatpush1.msra.mxu0 0.0
        %315 = vmatprep.subr.mxu0 0.0
        %316 = vmatpush1.msra.mxu0 0.0
        %317 = vmatprep.subr.mxu0 0.0
        %318 = vmatpush1.msra.mxu0 0.0
        %319 = vmatprep.subr.mxu0 0.0
        %320 = vmatpush1.msra.mxu0 0.0
        %321 = vmatprep.subr.mxu0 0.0
        %322 = vmatpush1.msra.mxu0 0.0
        %323 = vmatprep.mubr.f32.mxu0 0.0
        %324 = vmatmul.mubr.f32.gmra.mrb[0].mxu0 %v242
        %v325 = vpop.f32.mrb[0].mxu0
        %v326 = vadd.f32 0.0, %v325
        %v327 = vpop.f32.mrb[0].mxu0
        %328 = vdwg.mxu0
        %329 = vmax.xlane.f32.xlu0 %v326
        %v330 = vpop.xlane.xlu0 %329
        %v331 = vsub.f32 %v326, %v330
        %v332 = vmul.f32 %v331, 1.442695
        %v333 = vpow.pop %v332
        %334 = vadd.xlane.f32.xlu0 %v333
        %v335 = vpop.xlane.xlu0 %334
        %v336 = vld [vmem:[#allocation7] sm:$0xff]
        %v337 = vld [vmem:[#allocation7 + $0x8] sm:$0xff]
        %v338 = vld [vmem:[#allocation7 + $0x10] sm:$0xff]
        %v339 = vld [vmem:[#allocation7 + $0x18] sm:$0xff]
        %v340 = vld [vmem:[#allocation7 + $0x20] sm:$0xff]
        %v341 = vld [vmem:[#allocation7 + $0x28] sm:$0xff]
        %v342 = vld [vmem:[#allocation7 + $0x30] sm:$0xff]
        %v343 = vld [vmem:[#allocation7 + $0x38] sm:$0xff]
        %v344 = vld [vmem:[#allocation7 + $0x40] sm:$0xff]
        %v345 = vld [vmem:[#allocation7 + $0x48] sm:$0xff]
        %v346 = vld [vmem:[#allocation7 + $0x50] sm:$0xff]
        %v347 = vld [vmem:[#allocation7 + $0x58] sm:$0xff]
        %v348 = vld [vmem:[#allocation7 + $0x60] sm:$0xff]
        %v349 = vld [vmem:[#allocation7 + $0x68] sm:$0xff]
        %v350 = vld [vmem:[#allocation7 + $0x70] sm:$0xff]
        %v351 = vld [vmem:[#allocation7 + $0x78] sm:$0xff]
        %352 = vmatprep.subr.mxu0 0.0
        %353 = vmatpush1.msra.mxu0 %v336
        %354 = vmatprep.subr.mxu0 0.0
        %355 = vmatpush1.msra.mxu0 %v337
        %356 = vmatprep.subr.mxu0 0.0
        %357 = vmatpush1.msra.mxu0 %v338
        %358 = vmatprep.subr.mxu0 0.0
        %359 = vmatpush1.msra.mxu0 %v339
        %360 = vmatprep.subr.mxu0 0.0
        %361 = vmatpush1.msra.mxu0 %v340
        %362 = vmatprep.subr.mxu0 0.0
        %363 = vmatpush1.msra.mxu0 %v341
        %364 = vmatprep.subr.mxu0 0.0
        %365 = vmatpush1.msra.mxu0 %v342
        %366 = vmatprep.subr.mxu0 0.0
        %367 = vmatpush1.msra.mxu0 %v343
        %368 = vmatprep.subr.mxu0 0.0
        %369 = vmatpush1.msra.mxu0 %v344
        %370 = vmatprep.subr.mxu0 0.0
        %371 = vmatpush1.msra.mxu0 %v345
        %372 = vmatprep.subr.mxu0 0.0
        %373 = vmatpush1.msra.mxu0 %v346
        %374 = vmatprep.subr.mxu0 0.0
        %375 = vmatpush1.msra.mxu0 %v347
        %376 = vmatprep.subr.mxu0 0.0
        %377 = vmatpush1.msra.mxu0 %v348
        %378 = vmatprep.subr.mxu0 0.0
        %379 = vmatpush1.msra.mxu0 %v349
        %380 = vmatprep.subr.mxu0 0.0
        %381 = vmatpush1.msra.mxu0 %v350
        %382 = vmatprep.subr.mxu0 0.0
        %383 = vmatpush1.msra.mxu0 %v351
        %384 = vmatprep.subr.mxu0 0.0
        %385 = vmatpush1.msra.mxu0 0.0
        %386 = vmatprep.subr.mxu0 0.0
        %387 = vmatpush1.msra.mxu0 0.0
        %388 = vmatprep.subr.mxu0 0.0
        %389 = vmatpush1.msra.mxu0 0.0
        %390 = vmatprep.subr.mxu0 0.0
        %391 = vmatpush1.msra.mxu0 0.0
        %392 = vmatprep.subr.mxu0 0.0
        %393 = vmatpush1.msra.mxu0 0.0
        %394 = vmatprep.subr.mxu0 0.0
        %395 = vmatpush1.msra.mxu0 0.0
        %396 = vmatprep.subr.mxu0 0.0
        %397 = vmatpush1.msra.mxu0 0.0
        %398 = vmatprep.subr.mxu0 0.0
        %399 = vmatpush1.msra.mxu0 0.0
        %400 = vmatprep.subr.mxu0 0.0
        %401 = vmatpush1.msra.mxu0 0.0
        %402 = vmatprep.subr.mxu0 0.0
        %403 = vmatpush1.msra.mxu0 0.0
        %404 = vmatprep.subr.mxu0 0.0
        %405 = vmatpush1.msra.mxu0 0.0
        %406 = vmatprep.subr.mxu0 0.0
        %407 = vmatpush1.msra.mxu0 0.0
        %408 = vmatprep.subr.mxu0 0.0
        %409 = vmatpush1.msra.mxu0 0.0
        %410 = vmatprep.subr.mxu0 0.0
        %411 = vmatpush1.msra.mxu0 0.0
        %412 = vmatprep.subr.mxu0 0.0
        %413 = vmatpush1.msra.mxu0 0.0
        %414 = vmatprep.subr.mxu0 0.0
        %415 = vmatpush1.msra.mxu0 0.0
        %416 = vmatprep.mubr.f32.mxu0 0.0
        %417 = vmatmul.mubr.f32.gmra.mrb[0].mxu0 %v333
        %v418 = vpop.f32.mrb[0].mxu0
        %v419 = vadd.f32 0.0, %v418
        %v420 = vpop.f32.mrb[0].mxu0
        %421 = vdwg.mxu0
        %v422 = vrcp.pop %v335
        %v423 = vmul.f32 %v419, %v422
        %v424 = vld [vmem:[%s3] sm:$0x1]
        %v426 = vlaneseq
        %v427 = vshrl.u32 %v426, 7
        %v428 = vsub.s32 0, %v427
        %v429 = vrot.slane %v424, %v428
        %v431 = vadd.f32 %v423, %v429
        %432 = vst [vmem:[%s241] sm:$0xff] %v431
        %s433 = sand.u32 %s119, 1
        %s434 = scalar_lea.sflag [#allocation4], %s433
        %s435 = sand.u32 %s119, 1
        %s436 = smul.addr %s435, 8
        %s437 = scalar_lea.vmem [#allocation8], %s436
        // Predicated region
        $region49: #{tpu_custom_call.1} parent=35 // pred_check
          %p438 = pneg %p129
        $region50: #{tpu_custom_call.1} parent=35 // pred_check_branch
          %440 = sbr.rel (%p438) target = $region52
        $region51: #{tpu_custom_call.1} parent=35 // pred_region
          %s442 = ssub.s32 128, 128
          %443 = vsyncadd %s434, %s442
          %s444 = smul.addr %s22, 128
          %s445 = scalar_lea.hbm %s4, %s444
          %s447 = sshll.u32 %s437, 4
          %s448 = int_to_ptr.vmem [resolvable:$true] %s447
          %450 = dma.vmem_to_hbm [thread:$0]  %s448, 128, %s445, %s434
        $region52: #{tpu_custom_call.1} parent=35 // pred_fallthru
          _
      $region36: #{tpu_custom_call.1} parent=5 // pred_fallthru
        _
      %p451 = scmp.le.s32.totalorder 2, %s17
      // Predicated region
      $region53: #{tpu_custom_call.1} parent=5 // pred_check
        %p452 = pneg %p451
      $region54: #{tpu_custom_call.1} parent=5 // pred_check_branch
        %454 = sbr.rel (%p452) target = $region56
      $region55: #{tpu_custom_call.1} parent=5 // pred_region
        %s455 = ssub.s32 %s17, 2
        // Predicated region
        $region57: #{tpu_custom_call.1} parent=55 // pred_check
          %p456 = pneg %p135
        $region58: #{tpu_custom_call.1} parent=55 // pred_check_branch
          %458 = sbr.rel (%p456) target = $region60
        $region59: #{tpu_custom_call.1} parent=55 // pred_region
          %s459 = sand.u32 %s120, 1
          %s460 = scalar_lea.sflag [#allocation4], %s459
          %s461 = sand.u32 %s120, 1
          %s462 = smul.addr %s461, 8
          %s463 = scalar_lea.vmem [#allocation8], %s462
          %464 = dma.done %s460, 128
        $region60: #{tpu_custom_call.1} parent=55 // pred_fallthru
          _
      $region56: #{tpu_custom_call.1} parent=5 // pred_fallthru
        _
    $region6: #{tpu_custom_call.1} parent=1 // loop_footer
      %s21 = sadd.s32 1, %s17
    $region7: #{tpu_custom_call.1} parent=1 // loop_footer_branch
      %16 = sbr.rel target = $region3
    $region8: #{tpu_custom_call.1} parent=1 // loop_exit
      _
    %465 = vsyncpa [#allocation3], 1
    %s466 = scalar_lea.sflag [#allocation3], 1
    %467 = vsyncpa %s466, 1
    %468 = vsyncpa [#allocation6], 1
    %469 = vsyncpa [#allocation4], 1
    %s470 = scalar_lea.sflag [#allocation4], 1
    %471 = vsyncpa %s470, 1

</llo_original>
